<compile_context>
chip_gen: v5e
topology: v5e:2x2
jax: 0.10.0
libtpu: 0.0.40
codegen_flags: <defaults>
</compile_context>

<pallas_src>
import jax
import jax.numpy as jnp
from jax.experimental import pallas as pl
from jax.experimental.pallas import tpu as pltpu

K_PAD = 896   # 784 -> 7 * 128 (lane-aligned contraction dim)
H_PAD = 128   # hidden 64 -> 128
O_PAD = 128   # output 10 -> 128 (lane-dense stores)


def mlp_kernel(x_ref, w1_ref, b1_ref, w2_ref, b2_ref, w3_ref, b3_ref, o_ref):
    # x: (TM, 896) bf16   w1: (896, 128) bf16   w2/w3: (128, 128) bf16
    # b1/b2/b3: (1, 128) f32    o: (TM, 128) f32
    x = x_ref[...]
    h1 = jnp.dot(x, w1_ref[...], preferred_element_type=jnp.float32)
    h1 = jnp.maximum(h1 + b1_ref[...], 0.0)                       # f32 epilogue
    h2 = jnp.dot(h1.astype(jnp.bfloat16), w2_ref[...],
                 preferred_element_type=jnp.float32)
    h2 = jnp.maximum(h2 + b2_ref[...], 0.0)
    out = jnp.dot(h2.astype(jnp.bfloat16), w3_ref[...],
                  preferred_element_type=jnp.float32)
    o_ref[...] = (out + b3_ref[...]).astype(o_ref.dtype)


def _pad2(a, rows, cols):
    r, c = a.shape
    return jnp.pad(a, ((0, rows - r), (0, cols - c)))


def mlp_mnist_forward(x_nchw, params, tm=512):
    """Forward pass of mlp_MNIST. x_nchw: (B, C, H, W) float32 -> (B, 10) f32."""
    w1, b1, w2, b2, w3, b3 = params
    B = x_nchw.shape[0]
    n_out = w3.shape[1]

    # --- pad / cast weights to lane-dense bf16 (zero padding keeps semantics) ---
    w1p = _pad2(w1, K_PAD, H_PAD).astype(jnp.bfloat16)
    w2p = _pad2(w2, H_PAD, H_PAD).astype(jnp.bfloat16)
    w3p = _pad2(w3, H_PAD, O_PAD).astype(jnp.bfloat16)
    b1p = _pad2(b1, 1, H_PAD)   # f32 biases (epilogue stays f32)
    b2p = _pad2(b2, 1, H_PAD)
    b3p = _pad2(b3, 1, O_PAD)

    # --- flatten + pad input: features 784 -> 896, batch -> multiple of TM ---
    x_flat = x_nchw.reshape(B, -1)
    k = x_flat.shape[1]
    b8 = pl.cdiv(B, 8) * 8
    tm = max(8, min(tm, b8))
    tm = pl.cdiv(tm, 8) * 8
    b_pad = pl.cdiv(b8, tm) * tm
    x_p = jnp.pad(x_flat, ((0, b_pad - B), (0, K_PAD - k))).astype(jnp.bfloat16)

    grid = (b_pad // tm,)
    resident = lambda i: (0, 0)      # weights/biases stay pinned in VMEM

    flops = 2 * b_pad * (K_PAD * H_PAD + H_PAD * H_PAD + H_PAD * O_PAD)
    bytes_accessed = (
        x_p.size * 2
        + (w1p.size + w2p.size + w3p.size) * 2
        + (b1p.size + b2p.size + b3p.size) * 4
        + b_pad * O_PAD * 4
    )

    out = pl.pallas_call(
        mlp_kernel,
        out_shape=jax.ShapeDtypeStruct((b_pad, O_PAD), jnp.float32),
        grid=grid,
        in_specs=[
            pl.BlockSpec((tm, K_PAD), lambda i: (i, 0)),   # streamed x tile
            pl.BlockSpec((K_PAD, H_PAD), resident),
            pl.BlockSpec((1, H_PAD), resident),
            pl.BlockSpec((H_PAD, H_PAD), resident),
            pl.BlockSpec((1, H_PAD), resident),
            pl.BlockSpec((H_PAD, O_PAD), resident),
            pl.BlockSpec((1, O_PAD), resident),
        ],
        out_specs=pl.BlockSpec((tm, O_PAD), lambda i: (i, 0)),
        compiler_params=pltpu.CompilerParams(
            dimension_semantics=("parallel",)),
        cost_estimate=pl.CostEstimate(
            flops=flops, transcendentals=0, bytes_accessed=bytes_accessed),
    )(x_p, w1p, b1p, w2p, b2p, w3p, b3p)

    return out[:B, :n_out]


def init_params(key, in_features=784, hidden=64, out=10):
    """PyTorch nn.Linear default init (U[-1/sqrt(fan_in), +1/sqrt(fan_in)]).
    Weights stored transposed as (in, out); biases as (1, out)."""
    ks = jax.random.split(key, 6)

    def linear(kw, kb, fan_in, fan_out):
        bound = 1.0 / jnp.sqrt(fan_in)
        w = jax.random.uniform(kw, (fan_in, fan_out), jnp.float32, -bound, bound)
        b = jax.random.uniform(kb, (1, fan_out), jnp.float32, -bound, bound)
        return w, b

    w1, b1 = linear(ks[0], ks[1], in_features, hidden)
    w2, b2 = linear(ks[2], ks[3], hidden, hidden)
    w3, b3 = linear(ks[4], ks[5], hidden, out)
    return (w1, b1, w2, b2, w3, b3)


def reference_forward(x_nchw, params):
    """Pure-JAX reference with the same bf16-matmul / f32-accumulate numerics."""
    w1, b1, w2, b2, w3, b3 = params

    def lin(x, w, b):
        return jnp.dot(x.astype(jnp.bfloat16), w.astype(jnp.bfloat16),
                       preferred_element_type=jnp.float32) + b

    x = x_nchw.reshape(x_nchw.shape[0], -1)
    h1 = jnp.maximum(lin(x, w1, b1), 0.0)
    h2 = jnp.maximum(lin(h1, w2, b2), 0.0)
    return lin(h2, w3, b3)


if __name__ == "__main__":
    key = jax.random.PRNGKey(0)
    kx, kp = jax.random.split(key)

    C, H, W = 1, 28, 28
    params = init_params(kp, in_features=C * H * W, hidden=64, out=10)

    # (batch_size, tile_m): small default case + multi-step grid + ragged batch.
    for B, tm in ((8, 512), (200, 64), (13, 64)):
        x = jax.random.normal(jax.random.fold_in(kx, B), (B, C, H, W),
                              dtype=jnp.float32)
        out = jax.block_until_ready(mlp_mnist_forward(x, params, tm=tm))
        ref = reference_forward(x, params)
        assert out.shape == (B, 10)
        assert jnp.allclose(out, ref, atol=2e-2, rtol=2e-2), (
            f"mismatch at B={B}: max err {jnp.max(jnp.abs(out - ref))}")

    print("KERNEL_OK")
</pallas_src>

<mosaic_0001>
module attributes {stable_mosaic.version = 11 : i64} {
  func.func @mlp_kernel(%arg0: i32, %arg1: memref<8x896xbf16, #tpu.memory_space<vmem>>, %arg2: memref<896x128xbf16, #tpu.memory_space<vmem>>, %arg3: memref<1x128xf32, #tpu.memory_space<vmem>>, %arg4: memref<128x128xbf16, #tpu.memory_space<vmem>>, %arg5: memref<1x128xf32, #tpu.memory_space<vmem>>, %arg6: memref<128x128xbf16, #tpu.memory_space<vmem>>, %arg7: memref<1x128xf32, #tpu.memory_space<vmem>>, %arg8: memref<8x128xf32, #tpu.memory_space<vmem>>) attributes {dimension_semantics = [#tpu.dimension_semantics<parallel>], iteration_bounds = array<i64: 1>, scalar_prefetch = 0 : i64, scratch_operands = 0 : i64, tpu.core_type = #tpu.core_type<tc>, window_params = [{transform_indices = @transform_0, window_bounds = array<i64: 8, 896>}, {pipeline_mode = #tpu.pipeline_mode<synchronous>, transform_indices = @transform_1, window_bounds = array<i64: 896, 128>}, {pipeline_mode = #tpu.pipeline_mode<synchronous>, transform_indices = @transform_2, window_bounds = array<i64: 1, 128>}, {pipeline_mode = #tpu.pipeline_mode<synchronous>, transform_indices = @transform_3, window_bounds = array<i64: 128, 128>}, {pipeline_mode = #tpu.pipeline_mode<synchronous>, transform_indices = @transform_4, window_bounds = array<i64: 1, 128>}, {pipeline_mode = #tpu.pipeline_mode<synchronous>, transform_indices = @transform_5, window_bounds = array<i64: 128, 128>}, {pipeline_mode = #tpu.pipeline_mode<synchronous>, transform_indices = @transform_6, window_bounds = array<i64: 1, 128>}, {transform_indices = @transform_7, window_bounds = array<i64: 8, 128>}]} {
    %c0 = arith.constant 0 : index
    %c0_0 = arith.constant 0 : index
    %0 = vector.load %arg1[%c0, %c0_0] : memref<8x896xbf16, #tpu.memory_space<vmem>>, vector<8x896xbf16>
    %c0_1 = arith.constant 0 : index
    %c0_2 = arith.constant 0 : index
    %1 = vector.load %arg2[%c0_1, %c0_2] : memref<896x128xbf16, #tpu.memory_space<vmem>>, vector<896x128xbf16>
    %cst = arith.constant dense<0.000000e+00> : vector<8x128xf32>
    %2 = tpu.matmul %0, %1, %cst {dimension_numbers = #tpu.dot_dimension_numbers<[1], [0], [0], [1], [0, 0, 1, 1], [], []>} : vector<8x896xbf16>, vector<896x128xbf16>, vector<8x128xf32> -> vector<8x128xf32>
    %c0_3 = arith.constant 0 : index
    %c0_4 = arith.constant 0 : index
    %3 = vector.load %arg3[%c0_3, %c0_4] : memref<1x128xf32, #tpu.memory_space<vmem>>, vector<1x128xf32>
    %4 = vector.broadcast %3 : vector<1x128xf32> to vector<8x128xf32>
    %5 = arith.addf %2, %4 : vector<8x128xf32>
    %cst_5 = arith.constant 0.000000e+00 : f32
    %6 = vector.broadcast %cst_5 : f32 to vector<8x128xf32>
    %7 = arith.maximumf %5, %6 : vector<8x128xf32>
    %8 = arith.truncf %7 : vector<8x128xf32> to vector<8x128xbf16>
    %c0_6 = arith.constant 0 : index
    %c0_7 = arith.constant 0 : index
    %9 = vector.load %arg4[%c0_6, %c0_7] : memref<128x128xbf16, #tpu.memory_space<vmem>>, vector<128x128xbf16>
    %cst_8 = arith.constant dense<0.000000e+00> : vector<8x128xf32>
    %10 = tpu.matmul %8, %9, %cst_8 {dimension_numbers = #tpu.dot_dimension_numbers<[1], [0], [0], [1], [0, 0, 1, 1], [], []>} : vector<8x128xbf16>, vector<128x128xbf16>, vector<8x128xf32> -> vector<8x128xf32>
    %c0_9 = arith.constant 0 : index
    %c0_10 = arith.constant 0 : index
    %11 = vector.load %arg5[%c0_9, %c0_10] : memref<1x128xf32, #tpu.memory_space<vmem>>, vector<1x128xf32>
    %12 = vector.broadcast %11 : vector<1x128xf32> to vector<8x128xf32>
    %13 = arith.addf %10, %12 : vector<8x128xf32>
    %cst_11 = arith.constant 0.000000e+00 : f32
    %14 = vector.broadcast %cst_11 : f32 to vector<8x128xf32>
    %15 = arith.maximumf %13, %14 : vector<8x128xf32>
    %16 = arith.truncf %15 : vector<8x128xf32> to vector<8x128xbf16>
    %c0_12 = arith.constant 0 : index
    %c0_13 = arith.constant 0 : index
    %17 = vector.load %arg6[%c0_12, %c0_13] : memref<128x128xbf16, #tpu.memory_space<vmem>>, vector<128x128xbf16>
    %cst_14 = arith.constant dense<0.000000e+00> : vector<8x128xf32>
    %18 = tpu.matmul %16, %17, %cst_14 {dimension_numbers = #tpu.dot_dimension_numbers<[1], [0], [0], [1], [0, 0, 1, 1], [], []>} : vector<8x128xbf16>, vector<128x128xbf16>, vector<8x128xf32> -> vector<8x128xf32>
    %c0_15 = arith.constant 0 : index
    %c0_16 = arith.constant 0 : index
    %19 = vector.load %arg7[%c0_15, %c0_16] : memref<1x128xf32, #tpu.memory_space<vmem>>, vector<1x128xf32>
    %20 = vector.broadcast %19 : vector<1x128xf32> to vector<8x128xf32>
    %21 = arith.addf %18, %20 : vector<8x128xf32>
    %c0_17 = arith.constant 0 : index
    %c0_18 = arith.constant 0 : index
    %22 = vector.load %arg8[%c0_17, %c0_18] : memref<8x128xf32, #tpu.memory_space<vmem>>, vector<8x128xf32>
    tpu.vector_store %arg8[%c0_17, %c0_18], %21 {strides = array<i32>} : memref<8x128xf32, #tpu.memory_space<vmem>>, vector<8x128xf32>,
    return
  }
  func.func @transform_0(%arg0: i32) -> (i32, i32) {
    %c0_i32 = arith.constant 0 : i32
    %c0_i32_0 = arith.constant 0 : i32
    return %arg0, %c0_i32 : i32, i32
  }
  func.func @transform_1(%arg0: i32) -> (i32, i32) {
    %c0_i32 = arith.constant 0 : i32
    %c0_i32_0 = arith.constant 0 : i32
    %c0_i32_1 = arith.constant 0 : i32
    return %c0_i32, %c0_i32_0 : i32, i32
  }
  func.func @transform_2(%arg0: i32) -> (i32, i32) {
    %c0_i32 = arith.constant 0 : i32
    %c0_i32_0 = arith.constant 0 : i32
    %c0_i32_1 = arith.constant 0 : i32
    return %c0_i32, %c0_i32_0 : i32, i32
  }
  func.func @transform_3(%arg0: i32) -> (i32, i32) {
    %c0_i32 = arith.constant 0 : i32
    %c0_i32_0 = arith.constant 0 : i32
    %c0_i32_1 = arith.constant 0 : i32
    return %c0_i32, %c0_i32_0 : i32, i32
  }
  func.func @transform_4(%arg0: i32) -> (i32, i32) {
    %c0_i32 = arith.constant 0 : i32
    %c0_i32_0 = arith.constant 0 : i32
    %c0_i32_1 = arith.constant 0 : i32
    return %c0_i32, %c0_i32_0 : i32, i32
  }
  func.func @transform_5(%arg0: i32) -> (i32, i32) {
    %c0_i32 = arith.constant 0 : i32
    %c0_i32_0 = arith.constant 0 : i32
    %c0_i32_1 = arith.constant 0 : i32
    return %c0_i32, %c0_i32_0 : i32, i32
  }
  func.func @transform_6(%arg0: i32) -> (i32, i32) {
    %c0_i32 = arith.constant 0 : i32
    %c0_i32_0 = arith.constant 0 : i32
    %c0_i32_1 = arith.constant 0 : i32
    return %c0_i32, %c0_i32_0 : i32, i32
  }
  func.func @transform_7(%arg0: i32) -> (i32, i32) {
    %c0_i32 = arith.constant 0 : i32
    %c0_i32_0 = arith.constant 0 : i32
    return %arg0, %c0_i32 : i32, i32
  }
}

</mosaic_0001>

<llo_original>
// kernel: tpu_custom_call.1
$region0: #{tpu_custom_call.1}
  #allocation0 [shape = 'u32[]', space=smem, size = 0x4, offset = 0x4, fixed_abs, tag = 'smem constant byte address 0x4 - core index']
  #allocation1 [shape = 'u32[72,128]{1,0:T(1,128)}', space=vmem, size = 0x9000, scoped, tag = 'internal scratch']
  %s0 = inlined_call_operand.hbm [shape: bf16[8,896], index: 0, kind: input, shape index: {}]
  %s1 = inlined_call_operand.hbm [shape: bf16[896,128], index: 1, kind: input, shape index: {}]
  %s2 = inlined_call_operand.vmem [shape: f32[1,128], index: 2, kind: input, shape index: {}]
  %s3 = inlined_call_operand.hbm [shape: bf16[128,128], index: 3, kind: input, shape index: {}]
  %s4 = inlined_call_operand.vmem [shape: f32[1,128], index: 4, kind: input, shape index: {}]
  %s5 = inlined_call_operand.hbm [shape: bf16[128,128], index: 5, kind: input, shape index: {}]
  %s6 = inlined_call_operand.vmem [shape: f32[1,128], index: 6, kind: input, shape index: {}]
  %s7 = inlined_call_operand.hbm [shape: f32[8,128], index: 7, kind: output, shape index: {}]
  %s8 = sld [smem:[#allocation0]]
  $region54: #{tpu_custom_call.1} parent=0
    _
  %s10 = ssub.s32 1, %s8
  %s11 = scalar_select 0, %s10, %s8
  $region1: #{tpu_custom_call.1} parent=0
    #allocation2 [shape = 'u8[14336]{0}', space=vmem, size = 0x3800, scoped, tag = 'input window, operand 0, single buffered']
    #allocation3 [shape = 's32[1]{0}', space=sflag, size = 0x4, scoped, tag = 'scoped memory for tpu_custom_call.1']
    #allocation4 [shape = 's32[1]{0}', space=sflag, size = 0x4, scoped, tag = 'scoped memory for tpu_custom_call.1']
    #allocation5 [shape = 'u8[229376]{0}', space=vmem, size = 0x38000, scoped, tag = 'input window, operand 1, single buffered']
    #allocation6 [shape = 's32[1]{0}', space=sflag, size = 0x4, scoped, tag = 'scoped memory for tpu_custom_call.1']
    #allocation7 [shape = 'u8[32768]{0}', space=vmem, size = 0x8000, scoped, tag = 'input window, operand 3, single buffered']
    #allocation8 [shape = 'u8[32768]{0}', space=vmem, size = 0x8000, scoped, tag = 'input window, operand 5, single buffered']
    #allocation9 [shape = 's32[1]{0}', space=sflag, size = 0x4, scoped, tag = 'scoped memory for tpu_custom_call.1']
    #allocation10 [shape = 'u8[4096]{0}', space=vmem, size = 0x1000, scoped, tag = 'output window, operand 0, single buffered']
    %12 = vsyncpa [#allocation3], 0
    %13 = vsyncpa [#allocation6], 0
    %14 = vsyncpa [#allocation9], 0
    %15 = vsyncpa [#allocation4], 0
    // Predicated region
    $region2: #{tpu_custom_call.1} parent=1 // pred_check
      _
    $region3: #{tpu_custom_call.1} parent=1 // pred_check_branch
      %17 = sbr.rel (0) target = $region5
    $region4: #{tpu_custom_call.1} parent=1 // pred_region
      %19 = vsyncadd [#allocation3], 0
      %s21 = sshll.u32 %s0, 4
      %s22 = int_to_ptr.hbm [resolvable:$true] %s21
      %s23 = sshll.u32 [#allocation2], 4
      %s24 = int_to_ptr.vmem [resolvable:$true] %s23
      %26 = dma.hbm_to_vmem [thread:$0]  %s22, 448, %s24, [#allocation3]
    $region5: #{tpu_custom_call.1} parent=1 // pred_fallthru
      _
    // Predicated region
    $region6: #{tpu_custom_call.1} parent=1 // pred_check
      _
    $region7: #{tpu_custom_call.1} parent=1 // pred_check_branch
      %28 = sbr.rel (0) target = $region9
    $region8: #{tpu_custom_call.1} parent=1 // pred_region
      %30 = vsyncadd [#allocation6], 0
      %s31 = sshll.u32 %s1, 4
      %s32 = int_to_ptr.hbm [resolvable:$true] %s31
      %s33 = sshll.u32 [#allocation5], 4
      %s34 = int_to_ptr.vmem [resolvable:$true] %s33
      %39 = dma.hbm_to_vmem [thread:$0]  %s32, 7168, %s34, [#allocation6], 64, 64, 4
    $region9: #{tpu_custom_call.1} parent=1 // pred_fallthru
      _
    // Predicated region
    $region10: #{tpu_custom_call.1} parent=1 // pred_check
      _
    $region11: #{tpu_custom_call.1} parent=1 // pred_check_branch
      %41 = sbr.rel (0) target = $region13
    $region12: #{tpu_custom_call.1} parent=1 // pred_region
      _
    $region13: #{tpu_custom_call.1} parent=1 // pred_fallthru
      _
    // Predicated region
    $region14: #{tpu_custom_call.1} parent=1 // pred_check
      _
    $region15: #{tpu_custom_call.1} parent=1 // pred_check_branch
      %43 = sbr.rel (0) target = $region17
    $region16: #{tpu_custom_call.1} parent=1 // pred_region
      %45 = vsyncadd [#allocation6], 0
      %s46 = sshll.u32 %s3, 4
      %s47 = int_to_ptr.hbm [resolvable:$true] %s46
      %s48 = sshll.u32 [#allocation7], 4
      %s49 = int_to_ptr.vmem [resolvable:$true] %s48
      %54 = dma.hbm_to_vmem [thread:$0]  %s47, 1024, %s49, [#allocation6], 64, 64, 4
    $region17: #{tpu_custom_call.1} parent=1 // pred_fallthru
      _
    // Predicated region
    $region18: #{tpu_custom_call.1} parent=1 // pred_check
      _
    $region19: #{tpu_custom_call.1} parent=1 // pred_check_branch
      %56 = sbr.rel (0) target = $region21
    $region20: #{tpu_custom_call.1} parent=1 // pred_region
      _
    $region21: #{tpu_custom_call.1} parent=1 // pred_fallthru
      _
    // Predicated region
    $region22: #{tpu_custom_call.1} parent=1 // pred_check
      _
    $region23: #{tpu_custom_call.1} parent=1 // pred_check_branch
      %58 = sbr.rel (0) target = $region25
    $region24: #{tpu_custom_call.1} parent=1 // pred_region
      %60 = vsyncadd [#allocation9], 0
      %s61 = sshll.u32 %s5, 4
      %s62 = int_to_ptr.hbm [resolvable:$true] %s61
      %s63 = sshll.u32 [#allocation8], 4
      %s64 = int_to_ptr.vmem [resolvable:$true] %s63
      %69 = dma.hbm_to_vmem [thread:$0]  %s62, 1024, %s64, [#allocation9], 64, 64, 4
    $region25: #{tpu_custom_call.1} parent=1 // pred_fallthru
      _
    // Predicated region
    $region26: #{tpu_custom_call.1} parent=1 // pred_check
      _
    $region27: #{tpu_custom_call.1} parent=1 // pred_check_branch
      %71 = sbr.rel (0) target = $region29
    $region28: #{tpu_custom_call.1} parent=1 // pred_region
      _
    $region29: #{tpu_custom_call.1} parent=1 // pred_fallthru
      _
    // Predicated region
    $region30: #{tpu_custom_call.1} parent=1 // pred_check
      _
    $region31: #{tpu_custom_call.1} parent=1 // pred_check_branch
      %73 = sbr.rel (0) target = $region33
    $region32: #{tpu_custom_call.1} parent=1 // pred_region
      %75 = dma.done [#allocation3], 448
    $region33: #{tpu_custom_call.1} parent=1 // pred_fallthru
      _
    // Predicated region
    $region34: #{tpu_custom_call.1} parent=1 // pred_check
      _
    $region35: #{tpu_custom_call.1} parent=1 // pred_check_branch
      %77 = sbr.rel (0) target = $region37
    $region36: #{tpu_custom_call.1} parent=1 // pred_region
      %79 = dma.done [#allocation6], 7168
    $region37: #{tpu_custom_call.1} parent=1 // pred_fallthru
      _
    // Predicated region
    $region38: #{tpu_custom_call.1} parent=1 // pred_check
      _
    $region39: #{tpu_custom_call.1} parent=1 // pred_check_branch
      %81 = sbr.rel (0) target = $region41
    $region40: #{tpu_custom_call.1} parent=1 // pred_region
      %83 = dma.done [#allocation6], 1024
    $region41: #{tpu_custom_call.1} parent=1 // pred_fallthru
      _
    // Predicated region
    $region42: #{tpu_custom_call.1} parent=1 // pred_check
      _
    $region43: #{tpu_custom_call.1} parent=1 // pred_check_branch
      %85 = sbr.rel (0) target = $region45
    $region44: #{tpu_custom_call.1} parent=1 // pred_region
      %87 = dma.done [#allocation9], 1024
    $region45: #{tpu_custom_call.1} parent=1 // pred_fallthru
      _
    %v88 = vld [vmem:[#allocation2] sm:$0xff]
    %v89 = vld [vmem:[#allocation2 + $0x8] sm:$0xff]
    %v90 = vld [vmem:[#allocation2 + $0x10] sm:$0xff]
    %v91 = vld [vmem:[#allocation2 + $0x18] sm:$0xf]
    %v92 = vld [vmem:[#allocation5] sm:$0xf]
    %v93 = vld [vmem:[#allocation5 + $0x4] sm:$0xf]
    %v94 = vld [vmem:[#allocation5 + $0x8] sm:$0xf]
    %v95 = vld [vmem:[#allocation5 + $0xc] sm:$0xf]
    %v96 = vld [vmem:[#allocation5 + $0x10] sm:$0xf]
    %v97 = vld [vmem:[#allocation5 + $0x14] sm:$0xf]
    %v98 = vld [vmem:[#allocation5 + $0x18] sm:$0xf]
    %v99 = vld [vmem:[#allocation5 + $0x1c] sm:$0xf]
    %v100 = vld [vmem:[#allocation5 + $0x20] sm:$0xf]
    %v101 = vld [vmem:[#allocation5 + $0x24] sm:$0xf]
    %v102 = vld [vmem:[#allocation5 + $0x28] sm:$0xf]
    %v103 = vld [vmem:[#allocation5 + $0x2c] sm:$0xf]
    %v104 = vld [vmem:[#allocation5 + $0x30] sm:$0xf]
    %v105 = vld [vmem:[#allocation5 + $0x34] sm:$0xf]
    %v106 = vld [vmem:[#allocation5 + $0x38] sm:$0xf]
    %v107 = vld [vmem:[#allocation5 + $0x3c] sm:$0xf]
    %v108 = vld [vmem:[#allocation5 + $0x40] sm:$0xf]
    %v109 = vld [vmem:[#allocation5 + $0x44] sm:$0xf]
    %v110 = vld [vmem:[#allocation5 + $0x48] sm:$0xf]
    %v111 = vld [vmem:[#allocation5 + $0x4c] sm:$0xf]
    %v112 = vld [vmem:[#allocation5 + $0x50] sm:$0xf]
    %v113 = vld [vmem:[#allocation5 + $0x54] sm:$0xf]
    %v114 = vld [vmem:[#allocation5 + $0x58] sm:$0xf]
    %v115 = vld [vmem:[#allocation5 + $0x5c] sm:$0xf]
    %v116 = vld [vmem:[#allocation5 + $0x60] sm:$0xf]
    %v117 = vld [vmem:[#allocation5 + $0x64] sm:$0xf]
    %v118 = vld [vmem:[#allocation5 + $0x68] sm:$0xf]
    %v119 = vld [vmem:[#allocation5 + $0x6c] sm:$0xf]
    %v120 = vld [vmem:[#allocation5 + $0x70] sm:$0xf]
    %v121 = vld [vmem:[#allocation5 + $0x74] sm:$0xf]
    %v122 = vld [vmem:[#allocation5 + $0x78] sm:$0xf]
    %v123 = vld [vmem:[#allocation5 + $0x7c] sm:$0xf]
    %v124 = vld [vmem:[#allocation5 + $0x80] sm:$0xf]
    %v125 = vld [vmem:[#allocation5 + $0x84] sm:$0xf]
    %v126 = vld [vmem:[#allocation5 + $0x88] sm:$0xf]
    %v127 = vld [vmem:[#allocation5 + $0x8c] sm:$0xf]
    %v128 = vld [vmem:[#allocation5 + $0x90] sm:$0xf]
    %v129 = vld [vmem:[#allocation5 + $0x94] sm:$0xf]
    %v130 = vld [vmem:[#allocation5 + $0x98] sm:$0xf]
    %v131 = vld [vmem:[#allocation5 + $0x9c] sm:$0xf]
    %v132 = vld [vmem:[#allocation5 + $0xa0] sm:$0xf]
    %v133 = vld [vmem:[#allocation5 + $0xa4] sm:$0xf]
    %v134 = vld [vmem:[#allocation5 + $0xa8] sm:$0xf]
    %v135 = vld [vmem:[#allocation5 + $0xac] sm:$0xf]
    %v136 = vld [vmem:[#allocation5 + $0xb0] sm:$0xf]
    %v137 = vld [vmem:[#allocation5 + $0xb4] sm:$0xf]
    %v138 = vld [vmem:[#allocation5 + $0xb8] sm:$0xf]
    %v139 = vld [vmem:[#allocation5 + $0xbc] sm:$0xf]
    %v140 = vld [vmem:[#allocation5 + $0xc0] sm:$0xf]
    %v141 = vld [vmem:[#allocation5 + $0xc4] sm:$0xf]
    %v142 = vld [vmem:[#allocation5 + $0xc8] sm:$0xf]
    %v143 = vld [vmem:[#allocation5 + $0xcc] sm:$0xf]
    %v144 = vld [vmem:[#allocation5 + $0xd0] sm:$0xf]
    %v145 = vld [vmem:[#allocation5 + $0xd4] sm:$0xf]
    %v146 = vld [vmem:[#allocation5 + $0xd8] sm:$0xf]
    %v147 = vld [vmem:[#allocation5 + $0xdc] sm:$0xf]
    %v148 = vld [vmem:[#allocation5 + $0xe0] sm:$0xf]
    %v149 = vld [vmem:[#allocation5 + $0xe4] sm:$0xf]
    %v150 = vld [vmem:[#allocation5 + $0xe8] sm:$0xf]
    %v151 = vld [vmem:[#allocation5 + $0xec] sm:$0xf]
    %v152 = vld [vmem:[#allocation5 + $0xf0] sm:$0xf]
    %v153 = vld [vmem:[#allocation5 + $0xf4] sm:$0xf]
    %v154 = vld [vmem:[#allocation5 + $0xf8] sm:$0xf]
    %v155 = vld [vmem:[#allocation5 + $0xfc] sm:$0xf]
    %v156 = vld [vmem:[#allocation5 + $0x100] sm:$0xf]
    %v157 = vld [vmem:[#allocation5 + $0x104] sm:$0xf]
    %v158 = vld [vmem:[#allocation5 + $0x108] sm:$0xf]
    %v159 = vld [vmem:[#allocation5 + $0x10c] sm:$0xf]
    %v160 = vld [vmem:[#allocation5 + $0x110] sm:$0xf]
    %v161 = vld [vmem:[#allocation5 + $0x114] sm:$0xf]
    %v162 = vld [vmem:[#allocation5 + $0x118] sm:$0xf]
    %v163 = vld [vmem:[#allocation5 + $0x11c] sm:$0xf]
    %v164 = vld [vmem:[#allocation5 + $0x120] sm:$0xf]
    %v165 = vld [vmem:[#allocation5 + $0x124] sm:$0xf]
    %v166 = vld [vmem:[#allocation5 + $0x128] sm:$0xf]
    %v167 = vld [vmem:[#allocation5 + $0x12c] sm:$0xf]
    %v168 = vld [vmem:[#allocation5 + $0x130] sm:$0xf]
    %v169 = vld [vmem:[#allocation5 + $0x134] sm:$0xf]
    %v170 = vld [vmem:[#allocation5 + $0x138] sm:$0xf]
    %v171 = vld [vmem:[#allocation5 + $0x13c] sm:$0xf]
    %v172 = vld [vmem:[#allocation5 + $0x140] sm:$0xf]
    %v173 = vld [vmem:[#allocation5 + $0x144] sm:$0xf]
    %v174 = vld [vmem:[#allocation5 + $0x148] sm:$0xf]
    %v175 = vld [vmem:[#allocation5 + $0x14c] sm:$0xf]
    %v176 = vld [vmem:[#allocation5 + $0x150] sm:$0xf]
    %v177 = vld [vmem:[#allocation5 + $0x154] sm:$0xf]
    %v178 = vld [vmem:[#allocation5 + $0x158] sm:$0xf]
    %v179 = vld [vmem:[#allocation5 + $0x15c] sm:$0xf]
    %v180 = vld [vmem:[#allocation5 + $0x160] sm:$0xf]
    %v181 = vld [vmem:[#allocation5 + $0x164] sm:$0xf]
    %v182 = vld [vmem:[#allocation5 + $0x168] sm:$0xf]
    %v183 = vld [vmem:[#allocation5 + $0x16c] sm:$0xf]
    %v184 = vld [vmem:[#allocation5 + $0x170] sm:$0xf]
    %v185 = vld [vmem:[#allocation5 + $0x174] sm:$0xf]
    %v186 = vld [vmem:[#allocation5 + $0x178] sm:$0xf]
    %v187 = vld [vmem:[#allocation5 + $0x17c] sm:$0xf]
    %v188 = vld [vmem:[#allocation5 + $0x180] sm:$0xf]
    %v189 = vld [vmem:[#allocation5 + $0x184] sm:$0xf]
    %v190 = vld [vmem:[#allocation5 + $0x188] sm:$0xf]
    %v191 = vld [vmem:[#allocation5 + $0x18c] sm:$0xf]
    %v192 = vld [vmem:[#allocation5 + $0x190] sm:$0xf]
    %v193 = vld [vmem:[#allocation5 + $0x194] sm:$0xf]
    %v194 = vld [vmem:[#allocation5 + $0x198] sm:$0xf]
    %v195 = vld [vmem:[#allocation5 + $0x19c] sm:$0xf]
    %v196 = vld [vmem:[#allocation5 + $0x1a0] sm:$0xf]
    %v197 = vld [vmem:[#allocation5 + $0x1a4] sm:$0xf]
    %v198 = vld [vmem:[#allocation5 + $0x1a8] sm:$0xf]
    %v199 = vld [vmem:[#allocation5 + $0x1ac] sm:$0xf]
    %v200 = vld [vmem:[#allocation5 + $0x1b0] sm:$0xf]
    %v201 = vld [vmem:[#allocation5 + $0x1b4] sm:$0xf]
    %v202 = vld [vmem:[#allocation5 + $0x1b8] sm:$0xf]
    %v203 = vld [vmem:[#allocation5 + $0x1bc] sm:$0xf]
    %v204 = vld [vmem:[%s2] sm:$0x1]
    %v206 = vperm.slane %v204, 0
    %v212 = vunpack.c.l.b16 %v88
    %v213 = vunpack.c.h.b16 %v88
    %v214 = vunpack.c.l.b16 %v89
    %v215 = vunpack.c.h.b16 %v89
    %v216 = vunpack.c.l.b16 %v90
    %v217 = vunpack.c.h.b16 %v90
    %v218 = vunpack.c.l.b16 %v91
    %v219 = vpack.c.b16 %v212, %v212
    %v220 = vpack.c.b16 %v213, %v213
    %v221 = vpack.c.b16 %v214, %v214
    %v222 = vpack.c.b16 %v215, %v215
    %v223 = vpack.c.b16 %v216, %v216
    %v224 = vpack.c.b16 %v217, %v217
    %v225 = vpack.c.b16 %v218, %v218
    %v345 = vunpack.c.l.b16 %v92
    %v346 = vunpack.c.l.b16 %v93
    %v347 = vunpack.c.l.b16 %v94
    %v348 = vunpack.c.l.b16 %v95
    %v349 = vunpack.c.l.b16 %v96
    %v350 = vunpack.c.l.b16 %v97
    %v351 = vunpack.c.l.b16 %v98
    %v352 = vunpack.c.l.b16 %v99
    %v353 = vunpack.c.l.b16 %v100
    %v354 = vunpack.c.l.b16 %v101
    %v355 = vunpack.c.l.b16 %v102
    %v356 = vunpack.c.l.b16 %v103
    %v357 = vunpack.c.l.b16 %v104
    %v358 = vunpack.c.l.b16 %v105
    %v359 = vunpack.c.l.b16 %v106
    %v360 = vunpack.c.l.b16 %v107
    %v361 = vunpack.c.l.b16 %v108
    %v362 = vunpack.c.l.b16 %v109
    %v363 = vunpack.c.l.b16 %v110
    %v364 = vunpack.c.l.b16 %v111
    %v365 = vunpack.c.l.b16 %v112
    %v366 = vunpack.c.l.b16 %v113
    %v367 = vunpack.c.l.b16 %v114
    %v368 = vunpack.c.l.b16 %v115
    %v369 = vunpack.c.l.b16 %v116
    %v370 = vunpack.c.l.b16 %v117
    %v371 = vunpack.c.l.b16 %v118
    %v372 = vunpack.c.l.b16 %v119
    %v373 = vunpack.c.l.b16 %v120
    %v374 = vunpack.c.l.b16 %v121
    %v375 = vunpack.c.l.b16 %v122
    %v376 = vunpack.c.l.b16 %v123
    %v377 = vunpack.c.l.b16 %v124
    %v378 = vunpack.c.l.b16 %v125
    %v379 = vunpack.c.l.b16 %v126
    %v380 = vunpack.c.l.b16 %v127
    %v381 = vunpack.c.l.b16 %v128
    %v382 = vunpack.c.l.b16 %v129
    %v383 = vunpack.c.l.b16 %v130
    %v384 = vunpack.c.l.b16 %v131
    %v385 = vunpack.c.l.b16 %v132
    %v386 = vunpack.c.l.b16 %v133
    %v387 = vunpack.c.l.b16 %v134
    %v388 = vunpack.c.l.b16 %v135
    %v389 = vunpack.c.l.b16 %v136
    %v390 = vunpack.c.l.b16 %v137
    %v391 = vunpack.c.l.b16 %v138
    %v392 = vunpack.c.l.b16 %v139
    %v393 = vunpack.c.l.b16 %v140
    %v394 = vunpack.c.l.b16 %v141
    %v395 = vunpack.c.l.b16 %v142
    %v396 = vunpack.c.l.b16 %v143
    %v397 = vunpack.c.l.b16 %v144
    %v398 = vunpack.c.l.b16 %v145
    %v399 = vunpack.c.l.b16 %v146
    %v400 = vunpack.c.l.b16 %v147
    %v401 = vunpack.c.l.b16 %v148
    %v402 = vunpack.c.l.b16 %v149
    %v403 = vunpack.c.l.b16 %v150
    %v404 = vunpack.c.l.b16 %v151
    %v405 = vunpack.c.l.b16 %v152
    %v406 = vunpack.c.l.b16 %v153
    %v407 = vunpack.c.l.b16 %v154
    %v408 = vunpack.c.l.b16 %v155
    %v409 = vunpack.c.l.b16 %v156
    %v410 = vunpack.c.l.b16 %v157
    %v411 = vunpack.c.l.b16 %v158
    %v412 = vunpack.c.l.b16 %v159
    %v413 = vunpack.c.l.b16 %v160
    %v414 = vunpack.c.l.b16 %v161
    %v415 = vunpack.c.l.b16 %v162
    %v416 = vunpack.c.l.b16 %v163
    %v417 = vunpack.c.l.b16 %v164
    %v418 = vunpack.c.l.b16 %v165
    %v419 = vunpack.c.l.b16 %v166
    %v420 = vunpack.c.l.b16 %v167
    %v421 = vunpack.c.l.b16 %v168
    %v422 = vunpack.c.l.b16 %v169
    %v423 = vunpack.c.l.b16 %v170
    %v424 = vunpack.c.l.b16 %v171
    %v425 = vunpack.c.l.b16 %v172
    %v426 = vunpack.c.l.b16 %v173
    %v427 = vunpack.c.l.b16 %v174
    %v428 = vunpack.c.l.b16 %v175
    %v429 = vunpack.c.l.b16 %v176
    %v430 = vunpack.c.l.b16 %v177
    %v431 = vunpack.c.l.b16 %v178
    %v432 = vunpack.c.l.b16 %v179
    %v433 = vunpack.c.l.b16 %v180
    %v434 = vunpack.c.l.b16 %v181
    %v435 = vunpack.c.l.b16 %v182
    %v436 = vunpack.c.l.b16 %v183
    %v437 = vunpack.c.l.b16 %v184
    %v438 = vunpack.c.l.b16 %v185
    %v439 = vunpack.c.l.b16 %v186
    %v440 = vunpack.c.l.b16 %v187
    %v441 = vunpack.c.l.b16 %v188
    %v442 = vunpack.c.l.b16 %v189
    %v443 = vunpack.c.l.b16 %v190
    %v444 = vunpack.c.l.b16 %v191
    %v445 = vunpack.c.l.b16 %v192
    %v446 = vunpack.c.l.b16 %v193
    %v447 = vunpack.c.l.b16 %v194
    %v448 = vunpack.c.l.b16 %v195
    %v449 = vunpack.c.l.b16 %v196
    %v450 = vunpack.c.l.b16 %v197
    %v451 = vunpack.c.l.b16 %v198
    %v452 = vunpack.c.l.b16 %v199
    %v453 = vunpack.c.l.b16 %v200
    %v454 = vunpack.c.l.b16 %v201
    %v455 = vunpack.c.l.b16 %v202
    %v456 = vunpack.c.l.b16 %v203
    %v457 = vpack.c.b16 %v346, %v345
    %v458 = vpack.c.b16 %v348, %v347
    %v459 = vpack.c.b16 %v350, %v349
    %v460 = vpack.c.b16 %v352, %v351
    %v461 = vpack.c.b16 %v354, %v353
    %v462 = vpack.c.b16 %v356, %v355
    %v463 = vpack.c.b16 %v358, %v357
    %v464 = vpack.c.b16 %v360, %v359
    %v465 = vpack.c.b16 %v362, %v361
    %v466 = vpack.c.b16 %v364, %v363
    %v467 = vpack.c.b16 %v366, %v365
    %v468 = vpack.c.b16 %v368, %v367
    %v469 = vpack.c.b16 %v370, %v369
    %v470 = vpack.c.b16 %v372, %v371
    %v471 = vpack.c.b16 %v374, %v373
    %v472 = vpack.c.b16 %v376, %v375
    %v473 = vpack.c.b16 %v378, %v377
    %v474 = vpack.c.b16 %v380, %v379
    %v475 = vpack.c.b16 %v382, %v381
    %v476 = vpack.c.b16 %v384, %v383
    %v477 = vpack.c.b16 %v386, %v385
    %v478 = vpack.c.b16 %v388, %v387
    %v479 = vpack.c.b16 %v390, %v389
    %v480 = vpack.c.b16 %v392, %v391
    %v481 = vpack.c.b16 %v394, %v393
    %v482 = vpack.c.b16 %v396, %v395
    %v483 = vpack.c.b16 %v398, %v397
    %v484 = vpack.c.b16 %v400, %v399
    %v485 = vpack.c.b16 %v402, %v401
    %v486 = vpack.c.b16 %v404, %v403
    %v487 = vpack.c.b16 %v406, %v405
    %v488 = vpack.c.b16 %v408, %v407
    %v489 = vpack.c.b16 %v410, %v409
    %v490 = vpack.c.b16 %v412, %v411
    %v491 = vpack.c.b16 %v414, %v413
    %v492 = vpack.c.b16 %v416, %v415
    %v493 = vpack.c.b16 %v418, %v417
    %v494 = vpack.c.b16 %v420, %v419
    %v495 = vpack.c.b16 %v422, %v421
    %v496 = vpack.c.b16 %v424, %v423
    %v497 = vpack.c.b16 %v426, %v425
    %v498 = vpack.c.b16 %v428, %v427
    %v499 = vpack.c.b16 %v430, %v429
    %v500 = vpack.c.b16 %v432, %v431
    %v501 = vpack.c.b16 %v434, %v433
    %v502 = vpack.c.b16 %v436, %v435
    %v503 = vpack.c.b16 %v438, %v437
    %v504 = vpack.c.b16 %v440, %v439
    %v505 = vpack.c.b16 %v442, %v441
    %v506 = vpack.c.b16 %v444, %v443
    %v507 = vpack.c.b16 %v446, %v445
    %v508 = vpack.c.b16 %v448, %v447
    %v509 = vpack.c.b16 %v450, %v449
    %v510 = vpack.c.b16 %v452, %v451
    %v511 = vpack.c.b16 %v454, %v453
    %v512 = vpack.c.b16 %v456, %v455
    %569 = vmatpush.bf16.msra.mxu0 %v464
    %570 = vmatpush.bf16.msra.mxu0 %v463
    %571 = vmatpush.bf16.msra.mxu0 %v462
    %572 = vmatpush.bf16.msra.mxu0 %v461
    %573 = vmatpush.bf16.msra.mxu0 %v460
    %574 = vmatpush.bf16.msra.mxu0 %v459
    %575 = vmatpush.bf16.msra.mxu0 %v458
    %576 = vmatpush.bf16.msra.mxu0 %v457
    %577 = vmatmul.bf16.gmra.mxu0 %v219
    %v578 = vpop.f32.mrf.mxu0
    %v579 = vadd.f32 %v206, %v578
    %v580 = vpop.f32.mrf.mxu0
    %581 = vdwg.mxu0
    %582 = vmatpush.bf16.msra.mxu0 %v472
    %583 = vmatpush.bf16.msra.mxu0 %v471
    %584 = vmatpush.bf16.msra.mxu0 %v470
    %585 = vmatpush.bf16.msra.mxu0 %v469
    %586 = vmatpush.bf16.msra.mxu0 %v468
    %587 = vmatpush.bf16.msra.mxu0 %v467
    %588 = vmatpush.bf16.msra.mxu0 %v466
    %589 = vmatpush.bf16.msra.mxu0 %v465
    %590 = vmatmul.bf16.gmra.mxu0 %v220
    %v591 = vpop.f32.mrf.mxu0
    %v592 = vadd.f32 %v579, %v591
    %v593 = vpop.f32.mrf.mxu0
    %594 = vdwg.mxu0
    %595 = vmatpush.bf16.msra.mxu0 %v480
    %596 = vmatpush.bf16.msra.mxu0 %v479
    %597 = vmatpush.bf16.msra.mxu0 %v478
    %598 = vmatpush.bf16.msra.mxu0 %v477
    %599 = vmatpush.bf16.msra.mxu0 %v476
    %600 = vmatpush.bf16.msra.mxu0 %v475
    %601 = vmatpush.bf16.msra.mxu0 %v474
    %602 = vmatpush.bf16.msra.mxu0 %v473
    %603 = vmatmul.bf16.gmra.mxu0 %v221
    %v604 = vpop.f32.mrf.mxu0
    %v605 = vadd.f32 %v592, %v604
    %v606 = vpop.f32.mrf.mxu0
    %607 = vdwg.mxu0
    %608 = vmatpush.bf16.msra.mxu0 %v488
    %609 = vmatpush.bf16.msra.mxu0 %v487
    %610 = vmatpush.bf16.msra.mxu0 %v486
    %611 = vmatpush.bf16.msra.mxu0 %v485
    %612 = vmatpush.bf16.msra.mxu0 %v484
    %613 = vmatpush.bf16.msra.mxu0 %v483
    %614 = vmatpush.bf16.msra.mxu0 %v482
    %615 = vmatpush.bf16.msra.mxu0 %v481
    %616 = vmatmul.bf16.gmra.mxu0 %v222
    %v617 = vpop.f32.mrf.mxu0
    %v618 = vadd.f32 %v605, %v617
    %v619 = vpop.f32.mrf.mxu0
    %620 = vdwg.mxu0
    %621 = vmatpush.bf16.msra.mxu0 %v496
    %622 = vmatpush.bf16.msra.mxu0 %v495
    %623 = vmatpush.bf16.msra.mxu0 %v494
    %624 = vmatpush.bf16.msra.mxu0 %v493
    %625 = vmatpush.bf16.msra.mxu0 %v492
    %626 = vmatpush.bf16.msra.mxu0 %v491
    %627 = vmatpush.bf16.msra.mxu0 %v490
    %628 = vmatpush.bf16.msra.mxu0 %v489
    %629 = vmatmul.bf16.gmra.mxu0 %v223
    %v630 = vpop.f32.mrf.mxu0
    %v631 = vadd.f32 %v618, %v630
    %v632 = vpop.f32.mrf.mxu0
    %633 = vdwg.mxu0
    %634 = vmatpush.bf16.msra.mxu0 %v504
    %635 = vmatpush.bf16.msra.mxu0 %v503
    %636 = vmatpush.bf16.msra.mxu0 %v502
    %637 = vmatpush.bf16.msra.mxu0 %v501
    %638 = vmatpush.bf16.msra.mxu0 %v500
    %639 = vmatpush.bf16.msra.mxu0 %v499
    %640 = vmatpush.bf16.msra.mxu0 %v498
    %641 = vmatpush.bf16.msra.mxu0 %v497
    %642 = vmatmul.bf16.gmra.mxu0 %v224
    %v643 = vpop.f32.mrf.mxu0
    %v644 = vadd.f32 %v631, %v643
    %v645 = vpop.f32.mrf.mxu0
    %646 = vdwg.mxu0
    %647 = vmatpush.bf16.msra.mxu0 %v512
    %648 = vmatpush.bf16.msra.mxu0 %v511
    %649 = vmatpush.bf16.msra.mxu0 %v510
    %650 = vmatpush.bf16.msra.mxu0 %v509
    %651 = vmatpush.bf16.msra.mxu0 %v508
    %652 = vmatpush.bf16.msra.mxu0 %v507
    %653 = vmatpush.bf16.msra.mxu0 %v506
    %654 = vmatpush.bf16.msra.mxu0 %v505
    %655 = vmatmul.bf16.gmra.mxu0 %v225
    %v656 = vpop.f32.mrf.mxu0
    %v657 = vadd.f32 %v644, %v656
    %v658 = vpop.f32.mrf.mxu0
    %659 = vdwg.mxu0
    %v660 = vmax.f32 %v657, 0.0
    %v661 = vpack.c.bf16 %v660, %v660
    %v662 = vld [vmem:[#allocation7] sm:$0xf]
    %v663 = vld [vmem:[#allocation7 + $0x4] sm:$0xf]
    %v664 = vld [vmem:[#allocation7 + $0x8] sm:$0xf]
    %v665 = vld [vmem:[#allocation7 + $0xc] sm:$0xf]
    %v666 = vld [vmem:[#allocation7 + $0x10] sm:$0xf]
    %v667 = vld [vmem:[#allocation7 + $0x14] sm:$0xf]
    %v668 = vld [vmem:[#allocation7 + $0x18] sm:$0xf]
    %v669 = vld [vmem:[#allocation7 + $0x1c] sm:$0xf]
    %v670 = vld [vmem:[#allocation7 + $0x20] sm:$0xf]
    %v671 = vld [vmem:[#allocation7 + $0x24] sm:$0xf]
    %v672 = vld [vmem:[#allocation7 + $0x28] sm:$0xf]
    %v673 = vld [vmem:[#allocation7 + $0x2c] sm:$0xf]
    %v674 = vld [vmem:[#allocation7 + $0x30] sm:$0xf]
    %v675 = vld [vmem:[#allocation7 + $0x34] sm:$0xf]
    %v676 = vld [vmem:[#allocation7 + $0x38] sm:$0xf]
    %v677 = vld [vmem:[#allocation7 + $0x3c] sm:$0xf]
    %v678 = vld [vmem:[%s4] sm:$0x1]
    %v680 = vperm.slane %v678, 0
    %v698 = vunpack.c.l.b16 %v662
    %v699 = vunpack.c.l.b16 %v663
    %v700 = vunpack.c.l.b16 %v664
    %v701 = vunpack.c.l.b16 %v665
    %v702 = vunpack.c.l.b16 %v666
    %v703 = vunpack.c.l.b16 %v667
    %v704 = vunpack.c.l.b16 %v668
    %v705 = vunpack.c.l.b16 %v669
    %v706 = vunpack.c.l.b16 %v670
    %v707 = vunpack.c.l.b16 %v671
    %v708 = vunpack.c.l.b16 %v672
    %v709 = vunpack.c.l.b16 %v673
    %v710 = vunpack.c.l.b16 %v674
    %v711 = vunpack.c.l.b16 %v675
    %v712 = vunpack.c.l.b16 %v676
    %v713 = vunpack.c.l.b16 %v677
    %v714 = vpack.c.b16 %v699, %v698
    %v715 = vpack.c.b16 %v701, %v700
    %v716 = vpack.c.b16 %v703, %v702
    %v717 = vpack.c.b16 %v705, %v704
    %v718 = vpack.c.b16 %v707, %v706
    %v719 = vpack.c.b16 %v709, %v708
    %v720 = vpack.c.b16 %v711, %v710
    %v721 = vpack.c.b16 %v713, %v712
    %730 = vmatpush.bf16.msra.mxu0 %v721
    %731 = vmatpush.bf16.msra.mxu0 %v720
    %732 = vmatpush.bf16.msra.mxu0 %v719
    %733 = vmatpush.bf16.msra.mxu0 %v718
    %734 = vmatpush.bf16.msra.mxu0 %v717
    %735 = vmatpush.bf16.msra.mxu0 %v716
    %736 = vmatpush.bf16.msra.mxu0 %v715
    %737 = vmatpush.bf16.msra.mxu0 %v714
    %738 = vmatmul.bf16.gmra.mxu0 %v661
    %v739 = vpop.f32.mrf.mxu0
    %v740 = vadd.f32 %v680, %v739
    %v741 = vpop.f32.mrf.mxu0
    %742 = vdwg.mxu0
    %v743 = vmax.f32 %v740, 0.0
    %v744 = vpack.c.bf16 %v743, %v743
    %v745 = vld [vmem:[#allocation8] sm:$0xf]
    %v746 = vld [vmem:[#allocation8 + $0x4] sm:$0xf]
    %v747 = vld [vmem:[#allocation8 + $0x8] sm:$0xf]
    %v748 = vld [vmem:[#allocation8 + $0xc] sm:$0xf]
    %v749 = vld [vmem:[#allocation8 + $0x10] sm:$0xf]
    %v750 = vld [vmem:[#allocation8 + $0x14] sm:$0xf]
    %v751 = vld [vmem:[#allocation8 + $0x18] sm:$0xf]
    %v752 = vld [vmem:[#allocation8 + $0x1c] sm:$0xf]
    %v753 = vld [vmem:[#allocation8 + $0x20] sm:$0xf]
    %v754 = vld [vmem:[#allocation8 + $0x24] sm:$0xf]
    %v755 = vld [vmem:[#allocation8 + $0x28] sm:$0xf]
    %v756 = vld [vmem:[#allocation8 + $0x2c] sm:$0xf]
    %v757 = vld [vmem:[#allocation8 + $0x30] sm:$0xf]
    %v758 = vld [vmem:[#allocation8 + $0x34] sm:$0xf]
    %v759 = vld [vmem:[#allocation8 + $0x38] sm:$0xf]
    %v760 = vld [vmem:[#allocation8 + $0x3c] sm:$0xf]
    %v761 = vld [vmem:[%s6] sm:$0x1]
    %v763 = vperm.slane %v761, 0
    %v781 = vunpack.c.l.b16 %v745
    %v782 = vunpack.c.l.b16 %v746
    %v783 = vunpack.c.l.b16 %v747
    %v784 = vunpack.c.l.b16 %v748
    %v785 = vunpack.c.l.b16 %v749
    %v786 = vunpack.c.l.b16 %v750
    %v787 = vunpack.c.l.b16 %v751
    %v788 = vunpack.c.l.b16 %v752
    %v789 = vunpack.c.l.b16 %v753
    %v790 = vunpack.c.l.b16 %v754
    %v791 = vunpack.c.l.b16 %v755
    %v792 = vunpack.c.l.b16 %v756
    %v793 = vunpack.c.l.b16 %v757
    %v794 = vunpack.c.l.b16 %v758
    %v795 = vunpack.c.l.b16 %v759
    %v796 = vunpack.c.l.b16 %v760
    %v797 = vpack.c.b16 %v782, %v781
    %v798 = vpack.c.b16 %v784, %v783
    %v799 = vpack.c.b16 %v786, %v785
    %v800 = vpack.c.b16 %v788, %v787
    %v801 = vpack.c.b16 %v790, %v789
    %v802 = vpack.c.b16 %v792, %v791
    %v803 = vpack.c.b16 %v794, %v793
    %v804 = vpack.c.b16 %v796, %v795
    %813 = vmatpush.bf16.msra.mxu0 %v804
    %814 = vmatpush.bf16.msra.mxu0 %v803
    %815 = vmatpush.bf16.msra.mxu0 %v802
    %816 = vmatpush.bf16.msra.mxu0 %v801
    %817 = vmatpush.bf16.msra.mxu0 %v800
    %818 = vmatpush.bf16.msra.mxu0 %v799
    %819 = vmatpush.bf16.msra.mxu0 %v798
    %820 = vmatpush.bf16.msra.mxu0 %v797
    %821 = vmatmul.bf16.gmra.mxu0 %v744
    %v822 = vpop.f32.mrf.mxu0
    %v823 = vadd.f32 %v763, %v822
    %v824 = vpop.f32.mrf.mxu0
    %825 = vdwg.mxu0
    %826 = vst [vmem:[#allocation10] sm:$0xff] %v823
    // Predicated region
    $region46: #{tpu_custom_call.1} parent=1 // pred_check
      _
    $region47: #{tpu_custom_call.1} parent=1 // pred_check_branch
      %828 = sbr.rel (0) target = $region49
    $region48: #{tpu_custom_call.1} parent=1 // pred_region
      %830 = vsyncadd [#allocation4], 0
      %s832 = sshll.u32 [#allocation10], 4
      %s833 = int_to_ptr.vmem [resolvable:$true] %s832
      %s834 = sshll.u32 %s7, 4
      %s835 = int_to_ptr.hbm [resolvable:$true] %s834
      %837 = dma.vmem_to_hbm [thread:$0]  %s833, 128, %s835, [#allocation4]
    $region49: #{tpu_custom_call.1} parent=1 // pred_fallthru
      _
    // Predicated region
    $region50: #{tpu_custom_call.1} parent=1 // pred_check
      _
    $region51: #{tpu_custom_call.1} parent=1 // pred_check_branch
      %839 = sbr.rel (0) target = $region53
    $region52: #{tpu_custom_call.1} parent=1 // pred_region
      %841 = dma.done [#allocation4], 128
    $region53: #{tpu_custom_call.1} parent=1 // pred_fallthru
      _
    %842 = vsyncpa [#allocation3], 1
    %843 = vsyncpa [#allocation6], 1
    %844 = vsyncpa [#allocation9], 1
    %845 = vsyncpa [#allocation4], 1

</llo_original>
